<compile_context>
chip_gen: v7x
topology: tpu7x:2x2x1
jax: 0.10.0
libtpu: 0.0.40
codegen_flags: <defaults>
</compile_context>

<pallas_src>
import functools

import jax
import jax.numpy as jnp
import numpy as np
from jax import lax
from jax.experimental import pallas as pl
from jax.experimental.pallas import tpu as pltpu


def _round_up(x, m):
    return ((x + m - 1) // m) * m


def _device_kind():
    try:
        return jax.devices()[0].device_kind.lower()
    except Exception:
        return ""


def _pick_q_tile(hw, prefer_small):
    """Query tile: multiple of 128 (lane-dense stores); exact divisors preferred
    (no masked boundary stores); smaller tiles preferred on v7x (64 MiB VMEM)."""
    if hw <= 128:
        return hw  # single tile; block extent == full array extent
    cands = (256, 128, 512) if prefer_small else (512, 256, 128)
    for c in cands:
        if hw % c == 0:
            return c
    for c in cands:  # ragged HW: cdiv grid + masked boundary stores
        if c <= hw:
            return c
    return 128


def _vmem_limit(buffer_bytes, kind):
    """Scoped-VMEM budget derived from actual buffer sizes, capped per generation."""
    cap = (100 << 20) if ("v5" in kind or "v6" in kind) else (48 << 20)
    want = int(buffer_bytes * 1.25) + (4 << 20)
    return int(max(32 << 20, min(want, cap)))


# --------------------------- Pass 1: fused K/V projection ---------------------------


def _kv_proj_kernel(x_ref, wkv_ref, bkv_ref, kv_ref):
    # (Ckp + C, C) @ (C, t) -> (Ckp + C, t), f32 accumulation, store in MXU dtype.
    x = x_ref[...].astype(wkv_ref.dtype)
    kv = jnp.dot(wkv_ref[...], x, preferred_element_type=jnp.float32)
    kv_ref[...] = (kv + bkv_ref[...]).astype(kv_ref.dtype)


# --------------------------- Pass 2: attention over precomputed KV ------------------


def _attention_kernel(kv_ref, x_q_ref, wq_ref, bq_ref, gamma_ref, o_ref, *,
                      ckp, softmax_dtype):
    mxu_dtype = kv_ref.dtype

    # Query projection for this tile: (Ckp, C) @ (C, tq) -> (Ckp, tq), f32 acc.
    q = jnp.dot(wq_ref[...], x_q_ref[...].astype(mxu_dtype),
                preferred_element_type=jnp.float32) + bq_ref[...]

    k = kv_ref[:ckp, :]   # (Ckp, HW)  mxu dtype
    v = kv_ref[ckp:, :]   # (C,  HW)   mxu dtype

    # energy[n, m] = sum_c q[c, n] * k[c, m]   (== bmm(proj_query, proj_key))
    energy = lax.dot_general(q.astype(mxu_dtype), k,
                             (((0,), (0,)), ((), ())),
                             preferred_element_type=jnp.float32)      # (tq, HW)

    # softmax over keys (dim = -1).  Row max / row sum / reciprocal in f32;
    # the exp / scale and the attn operand use softmax_dtype (bf16 on v6e/v7x).
    m = jnp.max(energy, axis=-1, keepdims=True)
    p = jnp.exp((energy - m).astype(softmax_dtype))
    l = jnp.sum(p.astype(jnp.float32), axis=-1, keepdims=True)
    inv_l = pl.reciprocal(l, approx=True)
    attn = p * inv_l.astype(softmax_dtype)                             # (tq, HW)

    # out[c, n] = sum_m v[c, m] * attn[n, m]   (== bmm(proj_value, attention^T))
    out = lax.dot_general(v, attn.astype(mxu_dtype),
                          (((1,), (1,)), ((), ())),
                          preferred_element_type=jnp.float32)          # (C, tq)

    # Residual re-read from the (already resident) input buffer at the end to
    # keep the (C, tq) f32 live range short.
    o_ref[...] = gamma_ref[0] * out + x_q_ref[...]


# --------------------------------- Wrapper ------------------------------------------


def attention_block(x_nchw, params, *, mxu_dtype=jnp.bfloat16):
    """x_nchw: (B, C, H, W) float32.  params: dict of weights (see init_params)."""
    B, C, H, W = x_nchw.shape
    HW = H * W
    Ck = max(C // 8, 1)
    Ckp = _round_up(Ck, 16)          # sublane/packing aligned for both f32 and bf16

    kind = _device_kind()
    mxu_dt = np.dtype(mxu_dtype)
    mxu_bytes = mxu_dt.itemsize
    is_bf16 = mxu_dt == np.dtype(jnp.bfloat16)
    # bf16 softmax numerator only where the VPU/EUP are bf16-capable (v6e/v7x).
    softmax_dtype = jnp.bfloat16 if (is_bf16 and ("v6" in kind or "v7" in kind)) \
        else jnp.float32
    sm_bytes = np.dtype(softmax_dtype).itemsize

    tq = _pick_q_tile(HW, prefer_small=("v7" in kind))
    nq = pl.cdiv(HW, tq)

    # NCHW -> (B, C, HW): a pure reshape, no transpose / extra HBM traffic.
    x_flat = x_nchw.reshape(B, C, HW)

    f32 = jnp.float32
    # Zero-pad the q/k 1x1-conv weights up to Ckp output channels (exact: padded
    # rows of q and k are identically zero and contribute nothing to the energy).
    wq_p = jnp.zeros((Ckp, C), f32).at[:Ck].set(params["wq"].astype(f32)).astype(mxu_dtype)
    bq_p = jnp.zeros((Ckp, 1), f32).at[:Ck, 0].set(params["bq"].astype(f32))
    wk_p = jnp.zeros((Ckp, C), f32).at[:Ck].set(params["wk"].astype(f32))
    bk_p = jnp.zeros((Ckp, 1), f32).at[:Ck, 0].set(params["bk"].astype(f32))
    # Fused [Wk; Wv]: K/V is a single lane-dense GEMM per (batch, HW-tile).
    w_kv = jnp.concatenate([wk_p, params["wv"].astype(f32)], axis=0).astype(mxu_dtype)
    b_kv = jnp.concatenate([bk_p, params["bv"].astype(f32).reshape(C, 1)], axis=0)
    gamma = params["gamma"].astype(f32).reshape(1)

    # ---------------- Pass 1: K/V projection -> HBM (mxu dtype) ----------------
    n_kv = pl.cdiv(HW, tq)
    kv_buf_bytes = (2 * C * tq * 4                          # x tile (dbl-buffered)
                    + 2 * (Ckp + C) * tq * mxu_bytes        # kv output tile
                    + 2 * ((Ckp + C) * C * mxu_bytes + (Ckp + C) * 4)
                    + (Ckp + C) * tq * 4)                   # f32 accumulator
    kv = pl.pallas_call(
        _kv_proj_kernel,
        out_shape=jax.ShapeDtypeStruct((B, Ckp + C, HW), mxu_dtype),
        grid_spec=pltpu.PrefetchScalarGridSpec(
            num_scalar_prefetch=0,
            grid=(B, n_kv),
            in_specs=[
                pl.BlockSpec((None, C, tq), lambda b, j: (b, 0, j)),
                pl.BlockSpec((Ckp + C, C), lambda b, j: (0, 0)),   # fused [Wk; Wv]
                pl.BlockSpec((Ckp + C, 1), lambda b, j: (0, 0)),   # fused [bk; bv]
            ],
            out_specs=pl.BlockSpec((None, Ckp + C, tq), lambda b, j: (b, 0, j)),
        ),
        compiler_params=pltpu.CompilerParams(
            dimension_semantics=("parallel", "parallel"),
            vmem_limit_bytes=_vmem_limit(kv_buf_bytes, kind),
        ),
    )(x_flat, w_kv, b_kv)

    # ---------------- Pass 2: attention ----------------
    attn_buf_bytes = (
        2 * (Ckp + C) * HW * mxu_bytes            # KV slab (dbl-buffered input)
        + 2 * C * tq * 4 + 2 * C * tq * 4         # query/residual tile + output
        + 2 * (Ckp * C * mxu_bytes + Ckp * 4)     # Wq / bq
        + tq * HW * (4 + 2 * sm_bytes)            # energy (f32) + p + attn
        + (Ckp + 2 * C) * tq * 4                  # q, f32 output accumulator
    )
    out_flat = pl.pallas_call(
        functools.partial(_attention_kernel, ckp=Ckp, softmax_dtype=softmax_dtype),
        out_shape=jax.ShapeDtypeStruct((B, C, HW), jnp.float32),
        grid_spec=pltpu.PrefetchScalarGridSpec(
            num_scalar_prefetch=0,
            grid=(B, nq),
            in_specs=[
                # Precomputed KV slab: index map ignores the query axis, so it is
                # only re-DMA'd when the batch index changes (block revisiting).
                pl.BlockSpec((None, Ckp + C, HW), lambda b, q: (b, 0, 0)),
                # Query / residual tile (f32).
                pl.BlockSpec((None, C, tq), lambda b, q: (b, 0, q)),
                pl.BlockSpec((Ckp, C), lambda b, q: (0, 0)),     # Wq (padded, mxu dtype)
                pl.BlockSpec((Ckp, 1), lambda b, q: (0, 0)),     # bq (padded, f32)
                pl.BlockSpec(memory_space=pltpu.SMEM),           # gamma scalar
            ],
            out_specs=pl.BlockSpec((None, C, tq), lambda b, q: (b, 0, q)),
        ),
        compiler_params=pltpu.CompilerParams(
            # Query tiles are fully independent now that KV comes from HBM, so
            # both axes are parallel -> megacore gets work even at B == 1.
            dimension_semantics=("parallel", "parallel"),
            vmem_limit_bytes=_vmem_limit(attn_buf_bytes, kind),
        ),
    )(kv, x_flat, wq_p, bq_p, gamma)

    # (B, C, HW) -> NCHW: again a free reshape.
    return out_flat.reshape(B, C, H, W)


def init_params(key, C):
    """Deterministic synthetic parameters matching nn.Conv2d(k=1) shapes."""
    Ck = C // 8
    k = jax.random.split(key, 6)
    scale = 1.0 / jnp.sqrt(C)
    return {
        "wq": scale * jax.random.normal(k[0], (Ck, C), jnp.float32),
        "bq": scale * jax.random.normal(k[1], (Ck,), jnp.float32),
        "wk": scale * jax.random.normal(k[2], (Ck, C), jnp.float32),
        "bk": scale * jax.random.normal(k[3], (Ck,), jnp.float32),
        "wv": scale * jax.random.normal(k[4], (C, C), jnp.float32),
        "bv": scale * jax.random.normal(k[5], (C,), jnp.float32),
        # nn.Parameter(torch.zeros(1)) -> gamma starts at 0; use a nonzero value
        # so the attention path is actually exercised numerically.
        "gamma": jnp.array([0.5], jnp.float32),
    }


def _reference(x_nchw, params):
    """Pure-JAX reproduction of the PyTorch forward for verification."""
    B, C, H, W = x_nchw.shape
    HW = H * W
    xf = x_nchw.reshape(B, C, HW)                               # (B, C, HW)
    pq = jnp.einsum("oc,bcn->bon", params["wq"], xf) + params["bq"][None, :, None]
    pk = jnp.einsum("oc,bcn->bon", params["wk"], xf) + params["bk"][None, :, None]
    pv = jnp.einsum("oc,bcn->bon", params["wv"], xf) + params["bv"][None, :, None]
    energy = jnp.einsum("bcn,bcm->bnm", pq, pk)                 # (B, HW, HW)
    attn = jax.nn.softmax(energy, axis=-1)
    out = jnp.einsum("bcm,bnm->bcn", pv, attn)                  # (B, C, HW)
    out = out.reshape(B, C, H, W)
    return params["gamma"][0] * out + x_nchw


if __name__ == "__main__":
    B, C, H, W = 2, 16, 16, 16        # Ck = 2 (padded to 16 in-kernel), HW = 256
    key = jax.random.PRNGKey(0)
    kx, kp, kr = jax.random.split(key, 3)
    x = jax.random.normal(kx, (B, C, H, W), jnp.float32)
    params = init_params(kp, C)

    ref = _reference(x, params)

    # f32 MXU path: strict check against the pure-JAX reference (tolerance
    # accounts for the approximate EUP reciprocal in the softmax denominator).
    out_f32 = jax.block_until_ready(attention_block(x, params, mxu_dtype=jnp.float32))
    assert out_f32.shape == (B, C, H, W)
    assert jnp.max(jnp.abs(out_f32 - ref)) < 1e-2, "f32 kernel mismatch vs reference"

    # bf16 MXU path (fast path on v6e/v7x, incl. bf16 softmax numerator there):
    # looser sanity check since bf16 operands perturb results at ~1e-2 level.
    out_bf16 = jax.block_until_ready(attention_block(x, params, mxu_dtype=jnp.bfloat16))
    assert out_bf16.shape == (B, C, H, W)
    assert jnp.max(jnp.abs(out_bf16 - ref)) < 2e-1, "bf16 kernel mismatch vs reference"

    # Ragged feature map (HW = 144): exercises the cdiv grid + masked boundary
    # stores on the query axis (keys are exact, so the softmax is unchanged).
    xr = jax.random.normal(kr, (1, C, 12, 12), jnp.float32)
    ref_r = _reference(xr, params)
    out_r = jax.block_until_ready(attention_block(xr, params, mxu_dtype=jnp.float32))
    assert out_r.shape == xr.shape
    assert jnp.max(jnp.abs(out_r - ref_r)) < 1e-2, "ragged-HW kernel mismatch vs reference"

    print("KERNEL_OK")
</pallas_src>

<mosaic_0001>
module attributes {stable_mosaic.version = 11 : i64} {
  func.func @_kv_proj_kernel(%arg0: i32, %arg1: i32, %arg2: memref<1x16x256xf32, #tpu.memory_space<vmem>>, %arg3: memref<32x16xf32, #tpu.memory_space<vmem>>, %arg4: memref<32x1xf32, #tpu.memory_space<vmem>>, %arg5: memref<1x32x256xf32, #tpu.memory_space<vmem>>) attributes {dimension_semantics = [#tpu.dimension_semantics<parallel>, #tpu.dimension_semantics<parallel>], iteration_bounds = array<i64: 2, 1>, scalar_prefetch = 0 : i64, scratch_operands = 0 : i64, tpu.core_type = #tpu.core_type<tc>, window_params = [{transform_indices = @transform_0, window_bounds = array<i64: 1, 16, 256>}, {pipeline_mode = #tpu.pipeline_mode<synchronous>, transform_indices = @transform_1, window_bounds = array<i64: 32, 16>}, {pipeline_mode = #tpu.pipeline_mode<synchronous>, transform_indices = @transform_2, window_bounds = array<i64: 32, 1>}, {transform_indices = @transform_3, window_bounds = array<i64: 1, 32, 256>}]} {
    %c0 = arith.constant 0 : index
    %c0_0 = arith.constant 0 : index
    %c0_1 = arith.constant 0 : index
    %0 = vector.load %arg2[%c0, %c0_0, %c0_1] : memref<1x16x256xf32, #tpu.memory_space<vmem>>, vector<1x16x256xf32>
    %1 = vector.shape_cast %0 : vector<1x16x256xf32> to vector<16x256xf32>
    %c0_2 = arith.constant 0 : index
    %c0_3 = arith.constant 0 : index
    %2 = vector.load %arg3[%c0_2, %c0_3] : memref<32x16xf32, #tpu.memory_space<vmem>>, vector<32x16xf32>
    %cst = arith.constant dense<0.000000e+00> : vector<32x256xf32>
    %3 = tpu.matmul %2, %1, %cst {dimension_numbers = #tpu.dot_dimension_numbers<[1], [0], [0], [1], [0, 0, 1, 1], [], []>} : vector<32x16xf32>, vector<16x256xf32>, vector<32x256xf32> -> vector<32x256xf32>
    %c0_4 = arith.constant 0 : index
    %c0_5 = arith.constant 0 : index
    %4 = vector.load %arg4[%c0_4, %c0_5] : memref<32x1xf32, #tpu.memory_space<vmem>>, vector<32x1xf32>
    %5 = vector.broadcast %4 : vector<32x1xf32> to vector<32x256xf32>
    %6 = arith.addf %3, %5 : vector<32x256xf32>
    %c0_6 = arith.constant 0 : index
    %c0_7 = arith.constant 0 : index
    %c0_8 = arith.constant 0 : index
    %7 = vector.load %arg5[%c0_6, %c0_7, %c0_8] : memref<1x32x256xf32, #tpu.memory_space<vmem>>, vector<1x32x256xf32>
    %8 = vector.shape_cast %7 : vector<1x32x256xf32> to vector<32x256xf32>
    %9 = vector.shape_cast %6 : vector<32x256xf32> to vector<1x32x256xf32>
    tpu.vector_store %arg5[%c0_6, %c0_7, %c0_8], %9 {strides = array<i32>} : memref<1x32x256xf32, #tpu.memory_space<vmem>>, vector<1x32x256xf32>,
    return
  }
  func.func @transform_0(%arg0: i32, %arg1: i32) -> (i32, i32, i32) {
    %c0_i32 = arith.constant 0 : i32
    %c0_i32_0 = arith.constant 0 : i32
    return %arg0, %c0_i32, %arg1 : i32, i32, i32
  }
  func.func @transform_1(%arg0: i32, %arg1: i32) -> (i32, i32) {
    %c0_i32 = arith.constant 0 : i32
    %c0_i32_0 = arith.constant 0 : i32
    %c0_i32_1 = arith.constant 0 : i32
    return %c0_i32, %c0_i32_0 : i32, i32
  }
  func.func @transform_2(%arg0: i32, %arg1: i32) -> (i32, i32) {
    %c0_i32 = arith.constant 0 : i32
    %c0_i32_0 = arith.constant 0 : i32
    %c0_i32_1 = arith.constant 0 : i32
    return %c0_i32, %c0_i32_0 : i32, i32
  }
  func.func @transform_3(%arg0: i32, %arg1: i32) -> (i32, i32, i32) {
    %c0_i32 = arith.constant 0 : i32
    %c0_i32_0 = arith.constant 0 : i32
    return %arg0, %c0_i32, %arg1 : i32, i32, i32
  }
}

</mosaic_0001>

<llo_original>
// kernel: tpu_custom_call.1
$region0: #{tpu_custom_call.1}
  #allocation0 [shape = 'u32[]', space=smem, size = 0x4, offset = 0x4, fixed_abs, tag = 'smem constant byte address 0x4 - core index']
  #allocation1 [shape = 'u32[144,128]{1,0:T(1,128)}', space=vmem, size = 0x12000, scoped, tag = 'internal scratch']
  %s0 = inlined_call_operand.vmem [shape: f32[2,16,256], index: 0, kind: input, shape index: {}]
  %s1 = inlined_call_operand.vmem [shape: f32[32,16], index: 1, kind: input, shape index: {}]
  %s2 = inlined_call_operand.vmem [shape: f32[32,1], index: 2, kind: input, shape index: {}]
  %s3 = inlined_call_operand.hbm [shape: f32[2,32,256], index: 3, kind: output, shape index: {}]
  %s4 = sld [smem:[#allocation0]]
  $region45: #{tpu_custom_call.1} parent=0
    _
  %s6 = ssub.s32 1, %s4
  %s7 = scalar_select 0, %s6, %s4
  $region1: #{tpu_custom_call.1} parent=0
    #allocation2 [shape = 'u8[65536]{0}', space=vmem, size = 0x10000, scoped, tag = 'output window, operand 0']
    #allocation3 [shape = 's32[2]{0}', space=sflag, size = 0x8, scoped, tag = 'scoped memory for tpu_custom_call.1']
    %8 = vsyncpa [#allocation3], 0
    %s9 = scalar_lea.sflag [#allocation3], 1
    %10 = vsyncpa %s9, 0
    loop: start=0, step=1, limit=4
    $region2: #{tpu_custom_call.1} parent=1 // loop_pre_header
      _
    $region3: #{tpu_custom_call.1} parent=1 // loop_header
      %s12 = sphi 0, %s16
      %p13 = scmp.ge.s32.totalorder %s12, 4
      %s19 = sphi 0, %s31
      %s20 = sphi 0, %s27
      %s21 = sphi 0, %s19
      %s22 = sphi 0, %s20
      %s23 = sphi 0, %s21
      %s24 = sphi 0, %s22
      %s36 = sphi 0, %s38
      %s39 = sphi 0, %s36
      %s40 = sphi 0, %s39
      %s56 = sphi 0, %s40
      %s60 = sphi 0, %s60
      %s62 = sphi 0, %s60
      %s63 = sphi 0, %s62
      %s77 = sphi 0, %s63
      %s81 = sphi 0, %s81
      %s83 = sphi 0, %s81
      %s84 = sphi 0, %s83
      %s98 = sphi 0, %s84
      %s106 = sphi 0, %s108
      %s109 = sphi 0, %s106
      %s110 = sphi 0, %s109
      %s126 = sphi 0, %s110
    $region4: #{tpu_custom_call.1} parent=1 // loop_header_branch
      %15 = sbr.rel (%p13) target = $region8
    $region5: #{tpu_custom_call.1} parent=1 // loop_body
      %s17 = ssub.s32 %s12, 1
      %s18 = ssub.s32 %s12, 2
      %s25 = sadd.s32 1, %s20
      %p26 = scmp.ge.s32.totalorder %s25, 1
      %s27 = scalar_select %p26, 0, %s25
      %s28 = sadd.s32 1, %s19
      %s29 = scalar_select %p26, %s28, %s19
      %p30 = scmp.ge.s32.totalorder %s29, 2
      %s31 = scalar_select %p30, 0, %s29
      %s32 = ssub.s32 %s19, %s31
      %s33 = ssub.s32 %s20, %s27
      %s34 = sor.u32 %s32, %s33
      %p35 = scmp.eq.s32.totalorder %s34, 0
      %s37 = sadd.s32 %s36, 1
      %s38 = scalar_select %p35, %s36, %s37
      %p41 = pneg %p35
      %p42 = scmp.eq.s32.totalorder %s12, 1
      %p43 = por %p41, %p42
      %p44 = scmp.ne.s32.totalorder %s36, %s39
      %p45 = scmp.eq.s32.totalorder %s12, 0
      %p46 = por %p44, %p45
      %p47 = scmp.ne.s32.totalorder %s36, %s39
      %p48 = scmp.eq.s32.totalorder %s17, 1
      %p49 = por %p47, %p48
      %p50 = scmp.ne.s32.totalorder %s39, %s40
      %p51 = scmp.eq.s32.totalorder %s17, 0
      %p52 = por %p50, %p51
      %p53 = scmp.ne.s32.totalorder %s39, %s40
      %p54 = scmp.eq.s32.totalorder %s18, 1
      %p55 = por %p53, %p54
      %p57 = scmp.ne.s32.totalorder %s40, %s56
      %p58 = scmp.eq.s32.totalorder %s18, 0
      %p59 = por %p57, %p58
      %s61 = sadd.s32 %s60, 1
      %p64 = scmp.eq.s32.totalorder %s12, 1
      %p65 = scmp.ne.s32.totalorder %s60, %s62
      %p66 = scmp.eq.s32.totalorder %s12, 0
      %p67 = por %p65, %p66
      %p68 = scmp.ne.s32.totalorder %s60, %s62
      %p69 = scmp.eq.s32.totalorder %s17, 1
      %p70 = por %p68, %p69
      %p71 = scmp.ne.s32.totalorder %s62, %s63
      %p72 = scmp.eq.s32.totalorder %s17, 0
      %p73 = por %p71, %p72
      %p74 = scmp.ne.s32.totalorder %s62, %s63
      %p75 = scmp.eq.s32.totalorder %s18, 1
      %p76 = por %p74, %p75
      %p78 = scmp.ne.s32.totalorder %s63, %s77
      %p79 = scmp.eq.s32.totalorder %s18, 0
      %p80 = por %p78, %p79
      %s82 = sadd.s32 %s81, 1
      %p85 = scmp.eq.s32.totalorder %s12, 1
      %p86 = scmp.ne.s32.totalorder %s81, %s83
      %p87 = scmp.eq.s32.totalorder %s12, 0
      %p88 = por %p86, %p87
      %p89 = scmp.ne.s32.totalorder %s81, %s83
      %p90 = scmp.eq.s32.totalorder %s17, 1
      %p91 = por %p89, %p90
      %p92 = scmp.ne.s32.totalorder %s83, %s84
      %p93 = scmp.eq.s32.totalorder %s17, 0
      %p94 = por %p92, %p93
      %p95 = scmp.ne.s32.totalorder %s83, %s84
      %p96 = scmp.eq.s32.totalorder %s18, 1
      %p97 = por %p95, %p96
      %p99 = scmp.ne.s32.totalorder %s84, %s98
      %p100 = scmp.eq.s32.totalorder %s18, 0
      %p101 = por %p99, %p100
      %s102 = ssub.s32 %s19, %s31
      %s103 = ssub.s32 %s20, %s27
      %s104 = sor.u32 %s102, %s103
      %p105 = scmp.eq.s32.totalorder %s104, 0
      %s107 = sadd.s32 %s106, 1
      %s108 = scalar_select %p105, %s106, %s107
      %p111 = pneg %p105
      %p112 = scmp.eq.s32.totalorder %s12, 1
      %p113 = por %p111, %p112
      %p114 = scmp.ne.s32.totalorder %s106, %s109
      %p115 = scmp.eq.s32.totalorder %s12, 0
      %p116 = por %p114, %p115
      %p117 = scmp.ne.s32.totalorder %s106, %s109
      %p118 = scmp.eq.s32.totalorder %s17, 1
      %p119 = por %p117, %p118
      %p120 = scmp.ne.s32.totalorder %s109, %s110
      %p121 = scmp.eq.s32.totalorder %s17, 0
      %p122 = por %p120, %p121
      %p123 = scmp.ne.s32.totalorder %s109, %s110
      %p124 = scmp.eq.s32.totalorder %s18, 1
      %p125 = por %p123, %p124
      %p127 = scmp.ne.s32.totalorder %s110, %s126
      %p128 = scmp.eq.s32.totalorder %s18, 0
      %p129 = por %p127, %p128
      %p130 = scmp.le.s32.totalorder 1, %s12
      %p131 = scmp.lt.s32.totalorder %s12, 3
      %p132 = pnand %p130, %p131
      %p133 = pneg %p132
      // Predicated region
      $region9: #{tpu_custom_call.1} parent=5 // pred_check
        _
      $region10: #{tpu_custom_call.1} parent=5 // pred_check_branch
        %135 = sbr.rel (%p132) target = $region12
      $region11: #{tpu_custom_call.1} parent=5 // pred_region
        %s136 = ssub.s32 %s12, 1
        // Predicated region
        $region13: #{tpu_custom_call.1} parent=11 // pred_check
          %p137 = pneg %p73
        $region14: #{tpu_custom_call.1} parent=11 // pred_check_branch
          %139 = sbr.rel (%p137) target = $region16
        $region15: #{tpu_custom_call.1} parent=11 // pred_region
          _
        $region16: #{tpu_custom_call.1} parent=11 // pred_fallthru
          _
        // Predicated region
        $region17: #{tpu_custom_call.1} parent=11 // pred_check
          %p140 = pneg %p94
        $region18: #{tpu_custom_call.1} parent=11 // pred_check_branch
          %142 = sbr.rel (%p140) target = $region20
        $region19: #{tpu_custom_call.1} parent=11 // pred_region
          _
        $region20: #{tpu_custom_call.1} parent=11 // pred_fallthru
          _
      $region12: #{tpu_custom_call.1} parent=5 // pred_fallthru
        _
      %p143 = scmp.lt.s32.totalorder %s12, 2
      // Predicated region
      $region21: #{tpu_custom_call.1} parent=5 // pred_check
        %p144 = pneg %p143
      $region22: #{tpu_custom_call.1} parent=5 // pred_check_branch
        %146 = sbr.rel (%p144) target = $region24
      $region23: #{tpu_custom_call.1} parent=5 // pred_region
        // Predicated region
        $region25: #{tpu_custom_call.1} parent=23 // pred_check
          %p147 = pneg %p46
        $region26: #{tpu_custom_call.1} parent=23 // pred_check_branch
          %149 = sbr.rel (%p147) target = $region28
        $region27: #{tpu_custom_call.1} parent=23 // pred_region
          %s150 = smul.u32 2, %s20
          %p151 = scmp.lt.s32.totalorder %s19, 1
          %s152 = scalar_select %p151, %s19, 1
          %p153 = scmp.lt.s32.totalorder %s150, 1
          %s154 = scalar_select %p153, %s150, 1
          %s155 = smul.addr %s152, 4
          %s156 = sadd.s32 %s154, %s155
          %s157 = smul.addr %s156, 8
          %s158 = scalar_lea.vmem %s0, %s157
          %s159 = smul.u32 2, %s20
        $region28: #{tpu_custom_call.1} parent=23 // pred_fallthru
          _
      $region24: #{tpu_custom_call.1} parent=5 // pred_fallthru
        _
      %p160 = scmp.le.s32.totalorder 1, %s12
      %p161 = scmp.lt.s32.totalorder %s12, 3
      %p162 = pnand %p160, %p161
      %p163 = pneg %p162
      // Predicated region
      $region29: #{tpu_custom_call.1} parent=5 // pred_check
        _
      $region30: #{tpu_custom_call.1} parent=5 // pred_check_branch
        %165 = sbr.rel (%p162) target = $region32
      $region31: #{tpu_custom_call.1} parent=5 // pred_region
        %s166 = ssub.s32 %s12, 1
        %s167 = smul.u32 2, %s22
        %p168 = scmp.lt.s32.totalorder %s21, 1
        %s169 = scalar_select %p168, %s21, 1
        %p170 = scmp.lt.s32.totalorder %s167, 1
        %s171 = scalar_select %p170, %s167, 1
        %s172 = smul.addr %s169, 4
        %s173 = sadd.s32 %s171, %s172
        %s174 = smul.addr %s173, 8
        %s175 = scalar_lea.vmem %s0, %s174
        %p176 = pneg %p52
        %p177 = pneg %p49
        %p178 = pneg %p73
        %p179 = pneg %p70
        %p180 = pneg %p94
        %p181 = pneg %p91
        %p182 = pneg %p122
        %p183 = pneg %p119
        %s184 = sand.u32 %s109, 1
        %s185 = scalar_lea.sflag [#allocation3], %s184
        %s186 = sand.u32 %s109, 1
        %s187 = smul.addr %s186, 64
        %s188 = scalar_lea.vmem [#allocation2], %s187
        %s189 = smul.u32 2, %s22
        %p190 = scmp.lt.s32.totalorder %s21, 1
        %s191 = scalar_select %p190, %s21, 1
        %p192 = scmp.lt.s32.totalorder %s189, 1
        %s193 = scalar_select %p192, %s189, 1
        %s194 = smul.addr %s191, 4
        %s195 = sadd.s32 %s193, %s194
        %s196 = smul.addr %s195, 8
        %s197 = scalar_lea.vmem %s0, %s196
        %s198 = smul.u32 2, %s22
        %s199 = smul.u32 2, %s22
        %v200 = vld [vmem:[%s197] sm:$0xff]
        %v201 = vld [vmem:[%s197 + $0x8] sm:$0xff]
        %v202 = vld [vmem:[%s197 + $0x10] sm:$0xff]
        %v203 = vld [vmem:[%s197 + $0x18] sm:$0xff]
        %v204 = vld [vmem:[%s1] sm:$0xff]
        %v205 = vld [vmem:[%s1 + $0x8] sm:$0xff]
        %v206 = vld [vmem:[%s1 + $0x10] sm:$0xff]
        %v207 = vld [vmem:[%s1 + $0x18] sm:$0xff]
        %v208 = vld [vmem:[%s2] sm:$0xff]
        %v209 = vld [vmem:[%s2 + $0x8] sm:$0xff]
        %v210 = vld [vmem:[%s2 + $0x10] sm:$0xff]
        %v211 = vld [vmem:[%s2 + $0x18] sm:$0xff]
        %213 = vset.pattern.permute.xlu0 0
        %214 = vperm.xlu0 %213, %v208
        %v215 = vpop.permute.xlu0 %214
        %218 = vset.pattern.permute.xlu0 0
        %219 = vperm.xlu0 %218, %v209
        %v220 = vpop.permute.xlu0 %219
        %223 = vset.pattern.permute.xlu0 0
        %224 = vperm.xlu0 %223, %v210
        %v225 = vpop.permute.xlu0 %224
        %228 = vset.pattern.permute.xlu0 0
        %229 = vperm.xlu0 %228, %v211
        %v230 = vpop.permute.xlu0 %229
        %vm232 = vcmask 130048
        %v234 = vsel %vm232, %v204, 0
        %v237 = vsel %vm232, %v205, 0
        %v240 = vsel %vm232, %v206, 0
        %v243 = vsel %vm232, %v207, 0
        %245 = vmatprep.subr.mxu0 %v201
        %246 = vmatpush1.msra.mxu0 %v200
        %247 = vmatprep.subr.mxu0 %v203
        %248 = vmatpush1.msra.mxu0 %v202
        %249 = vmatprep.subr.mxu0 0.0
        %250 = vmatpush1.msra.mxu0 0.0
        %251 = vmatprep.subr.mxu0 0.0
        %252 = vmatpush1.msra.mxu0 0.0
        %253 = vmatprep.subr.mxu0 0.0
        %254 = vmatpush1.msra.mxu0 0.0
        %255 = vmatprep.subr.mxu0 0.0
        %256 = vmatpush1.msra.mxu0 0.0
        %257 = vmatprep.subr.mxu0 0.0
        %258 = vmatpush1.msra.mxu0 0.0
        %259 = vmatprep.subr.mxu0 0.0
        %260 = vmatpush1.msra.mxu0 0.0
        %261 = vmatprep.subr.mxu0 0.0
        %262 = vmatpush1.msra.mxu0 0.0
        %263 = vmatprep.subr.mxu0 0.0
        %264 = vmatpush1.msra.mxu0 0.0
        %265 = vmatprep.subr.mxu0 0.0
        %266 = vmatpush1.msra.mxu0 0.0
        %267 = vmatprep.subr.mxu0 0.0
        %268 = vmatpush1.msra.mxu0 0.0
        %269 = vmatprep.subr.mxu0 0.0
        %270 = vmatpush1.msra.mxu0 0.0
        %271 = vmatprep.subr.mxu0 0.0
        %272 = vmatpush1.msra.mxu0 0.0
        %273 = vmatprep.subr.mxu0 0.0
        %274 = vmatpush1.msra.mxu0 0.0
        %275 = vmatprep.subr.mxu0 0.0
        %276 = vmatpush1.msra.mxu0 0.0
        %277 = vmatprep.subr.mxu0 0.0
        %278 = vmatpush1.msra.mxu0 0.0
        %279 = vmatprep.subr.mxu0 0.0
        %280 = vmatpush1.msra.mxu0 0.0
        %281 = vmatprep.subr.mxu0 0.0
        %282 = vmatpush1.msra.mxu0 0.0
        %283 = vmatprep.subr.mxu0 0.0
        %284 = vmatpush1.msra.mxu0 0.0
        %285 = vmatprep.subr.mxu0 0.0
        %286 = vmatpush1.msra.mxu0 0.0
        %287 = vmatprep.subr.mxu0 0.0
        %288 = vmatpush1.msra.mxu0 0.0
        %289 = vmatprep.subr.mxu0 0.0
        %290 = vmatpush1.msra.mxu0 0.0
        %291 = vmatprep.subr.mxu0 0.0
        %292 = vmatpush1.msra.mxu0 0.0
        %293 = vmatprep.subr.mxu0 0.0
        %294 = vmatpush1.msra.mxu0 0.0
        %295 = vmatprep.subr.mxu0 0.0
        %296 = vmatpush1.msra.mxu0 0.0
        %297 = vmatprep.subr.mxu0 0.0
        %298 = vmatpush1.msra.mxu0 0.0
        %299 = vmatprep.subr.mxu0 0.0
        %300 = vmatpush1.msra.mxu0 0.0
        %301 = vmatprep.subr.mxu0 0.0
        %302 = vmatpush1.msra.mxu0 0.0
        %303 = vmatprep.subr.mxu0 0.0
        %304 = vmatpush1.msra.mxu0 0.0
        %305 = vmatprep.subr.mxu0 0.0
        %306 = vmatpush1.msra.mxu0 0.0
        %307 = vmatprep.subr.mxu0 0.0
        %308 = vmatpush1.msra.mxu0 0.0
        %309 = vmatprep.mubr.f32.mxu0 0.0
        %310 = vmatmul.mubr.f32.gmra.mrb[0].mxu0 %v234
        %v311 = vpop.f32.mrb[0].mxu0
        %v312 = vadd.f32 %v215, %v311
        %v313 = vpop.f32.mrb[0].mxu0
        %v314 = vadd.f32 %v215, %v313
        %315 = vmatprep.mubr.f32.mxu0 0.0
        %316 = vmatmul.mubr.f32.gmra.mrb[0].mxu0 %v237
        %v317 = vpop.f32.mrb[0].mxu0
        %v318 = vadd.f32 %v220, %v317
        %v319 = vpop.f32.mrb[0].mxu0
        %v320 = vadd.f32 %v220, %v319
        %321 = vmatprep.mubr.f32.mxu0 0.0
        %322 = vmatmul.mubr.f32.gmra.mrb[0].mxu0 %v240
        %v323 = vpop.f32.mrb[0].mxu0
        %v324 = vadd.f32 %v225, %v323
        %v325 = vpop.f32.mrb[0].mxu0
        %v326 = vadd.f32 %v225, %v325
        %327 = vmatprep.mubr.f32.mxu0 0.0
        %328 = vmatmul.mubr.f32.gmra.mrb[0].mxu0 %v243
        %v329 = vpop.f32.mrb[0].mxu0
        %v330 = vadd.f32 %v230, %v329
        %v331 = vpop.f32.mrb[0].mxu0
        %v332 = vadd.f32 %v230, %v331
        %333 = vdwg.mxu0
        %334 = vst [vmem:[%s188] sm:$0xff] %v312
        %335 = vst [vmem:[%s188 + $0x8] sm:$0xff] %v314
        %336 = vst [vmem:[%s188 + $0x10] sm:$0xff] %v318
        %337 = vst [vmem:[%s188 + $0x18] sm:$0xff] %v320
        %338 = vst [vmem:[%s188 + $0x20] sm:$0xff] %v324
        %339 = vst [vmem:[%s188 + $0x28] sm:$0xff] %v326
        %340 = vst [vmem:[%s188 + $0x30] sm:$0xff] %v330
        %341 = vst [vmem:[%s188 + $0x38] sm:$0xff] %v332
        %s342 = sand.u32 %s109, 1
        %s343 = scalar_lea.sflag [#allocation3], %s342
        %s344 = sand.u32 %s109, 1
        %s345 = smul.addr %s344, 64
        %s346 = scalar_lea.vmem [#allocation2], %s345
        // Predicated region
        $region33: #{tpu_custom_call.1} parent=31 // pred_check
          %p347 = pneg %p119
        $region34: #{tpu_custom_call.1} parent=31 // pred_check_branch
          %349 = sbr.rel (%p347) target = $region36
        $region35: #{tpu_custom_call.1} parent=31 // pred_region
          %s350 = smul.u32 2, %s22
          %s352 = ssub.s32 1024, 1024
          %353 = vsyncadd %s343, %s352
          %s354 = smul.addr %s21, 8
          %s355 = sadd.s32 %s350, %s354
          %s356 = smul.addr %s355, 128
          %s357 = scalar_lea.hbm %s3, %s356
          %s358 = sshll.u32 %s346, 4
          %s359 = int_to_ptr.vmem [resolvable:$true] %s358
          %364 = dma.vmem_to_hbm [thread:$0]  %s359, 1024, %s357, %s343, 256, 256, 16
        $region36: #{tpu_custom_call.1} parent=31 // pred_fallthru
          _
      $region32: #{tpu_custom_call.1} parent=5 // pred_fallthru
        _
      %p365 = scmp.le.s32.totalorder 2, %s12
      // Predicated region
      $region37: #{tpu_custom_call.1} parent=5 // pred_check
        %p366 = pneg %p365
      $region38: #{tpu_custom_call.1} parent=5 // pred_check_branch
        %368 = sbr.rel (%p366) target = $region40
      $region39: #{tpu_custom_call.1} parent=5 // pred_region
        %s369 = ssub.s32 %s12, 2
        // Predicated region
        $region41: #{tpu_custom_call.1} parent=39 // pred_check
          %p370 = pneg %p125
        $region42: #{tpu_custom_call.1} parent=39 // pred_check_branch
          %372 = sbr.rel (%p370) target = $region44
        $region43: #{tpu_custom_call.1} parent=39 // pred_region
          %s373 = sand.u32 %s110, 1
          %s374 = scalar_lea.sflag [#allocation3], %s373
          %s375 = sand.u32 %s110, 1
          %s376 = smul.addr %s375, 64
          %s377 = scalar_lea.vmem [#allocation2], %s376
          %378 = dma.done %s374, 1024
        $region44: #{tpu_custom_call.1} parent=39 // pred_fallthru
          _
      $region40: #{tpu_custom_call.1} parent=5 // pred_fallthru
        _
    $region6: #{tpu_custom_call.1} parent=1 // loop_footer
      %s16 = sadd.s32 1, %s12
    $region7: #{tpu_custom_call.1} parent=1 // loop_footer_branch
      %11 = sbr.rel target = $region3
    $region8: #{tpu_custom_call.1} parent=1 // loop_exit
      _
    %379 = vsyncpa [#allocation3], 1
    %s380 = scalar_lea.sflag [#allocation3], 1
    %381 = vsyncpa %s380, 1

</llo_original>
